<compile_context>
chip_gen: v7x
topology: tpu7x:2x2x1
jax: 0.10.0
libtpu: 0.0.40
codegen_flags: <defaults>
</compile_context>

<pallas_src>
import functools

import jax
import jax.numpy as jnp
from jax.experimental import pallas as pl
from jax.experimental.pallas import tpu as pltpu


def _round_up(v, m):
    return ((v + m - 1) // m) * m


def _shift_toward_low(a, s):
    """result[:, j] = a[:, j + s] for j < w - s, else 0 (zero-fill lane shift)."""
    z = jnp.zeros((a.shape[0], s), a.dtype)
    return jnp.concatenate([a[:, s:], z], axis=1)


def _shift_toward_high(a, s):
    """result[:, j] = a[:, j - s] for j >= s, else 0 (zero-fill lane shift)."""
    z = jnp.zeros((a.shape[0], s), a.dtype)
    return jnp.concatenate([z, a[:, : a.shape[1] - s]], axis=1)


def _periodic_fill(vals, width, c, needed, grow_left):
    """Replicate a (bt, c) per-channel value with lane-period c inside a (bt, width)
    buffer, seeded at one edge and grown by log-doubling.  Only the `needed` lanes
    nearest the seeded edge are guaranteed filled (the rest may stay zero)."""
    bt = vals.shape[0]
    if width == c:
        buf = vals
    elif grow_left:
        buf = jnp.concatenate([jnp.zeros((bt, width - c), vals.dtype), vals], axis=1)
    else:
        buf = jnp.concatenate([vals, jnp.zeros((bt, width - c), vals.dtype)], axis=1)
    filled = c
    while filled < needed:
        s = filled
        buf = buf + (_shift_toward_low(buf, s) if grow_left else _shift_toward_high(buf, s))
        filled *= 2
    return buf


def _moving_avg_kernel(x_ref, *out_refs, kernel_size, pad, c, l, l_dense,
                       front_w, with_residual):
    """Dense (stride-1) sliding-window mean along the flattened time axis.

    x_ref:        (B_TILE, L * C)        one batch tile, time-major, channels minor
    out_refs[0]:  (B_TILE, L_dense * C)  dense pooled trend, same flattened layout
    out_refs[1]:  (B_TILE, L * C)        optional fused residual (x - trend)
    """
    trend_ref = out_refs[0]
    w_in = l * c
    w_out = l_dense * c

    xv = x_ref[...].astype(jnp.float32)  # single full-tile load; accumulate in f32

    # ---- replicate padding rebuilt in-register from just the two edge time steps ----
    if pad > 0:
        # Front piece is 128-aligned so `xv` lands lane-aligned in the concat;
        # the replicated x[:,0,:] values occupy its last pad*C lanes.
        first_vals = xv[:, :c]                 # x[:, 0, :]
        last_vals = xv[:, w_in - c:]           # x[:, L-1, :]
        front = _periodic_fill(first_vals, front_w, c, pad * c, grow_left=True)
        end = _periodic_fill(last_vals, pad * c, c, pad * c, grow_left=False)
        xp = jnp.concatenate([front, xv, end], axis=1)
    else:
        xp = xv
    b0 = front_w - pad * c                     # lane offset of output time step 0

    # ---- K-tap box sum via log-doubling binary decomposition ----
    # Invariant: cur[:, j] = sum_{k<n} xp[:, j + k*c];  pieces are consumed LSB-first.
    acc = None
    cur = xp
    off = 0
    n = 1
    rem = kernel_size
    while True:
        if rem & 1:
            start = b0 + off * c
            piece = cur[:, start:start + w_out]
            acc = piece if acc is None else acc + piece
            off += n
        rem >>= 1
        if rem == 0:
            break
        wcur = cur.shape[1]
        cur = cur[:, :wcur - n * c] + cur[:, n * c:]
        n *= 2

    trend = acc * jnp.float32(1.0 / kernel_size)
    trend_ref[...] = trend.astype(trend_ref.dtype)

    if with_residual:
        # Only emitted when l_dense == l and stride == 1 (guarded in the wrapper).
        out_refs[1][...] = (xv - trend).astype(out_refs[1].dtype)


def _pick_batch_tile(b, row_bytes, budget):
    """Largest batch tile that divides b, obeys the sublane-8 rule, fits the VMEM
    budget, and (when possible) leaves >=2 grid steps so both v7x cores get work."""
    if b % 8 != 0:
        return b                               # block dim must equal the full array dim
    divisors = [d for d in range(8, b + 1, 8) if b % d == 0]
    fit = [d for d in divisors if d * row_bytes <= budget] or [8]
    multi = [d for d in fit if d < b]
    return max(multi) if multi else max(fit)


def _moving_avg_pallas(x, kernel_size, stride, with_residual):
    b, l, c = x.shape
    pad = (kernel_size - 1) // 2
    l_dense = l + 2 * pad - kernel_size + 1    # stride-1 output length
    l_out = (l + 2 * pad - kernel_size) // stride + 1
    w_in = l * c
    w_out = l_dense * c
    front_w = _round_up(pad * c, 128) if pad > 0 else 0
    wp = front_w + w_in + pad * c              # in-register padded width
    esize = jnp.dtype(x.dtype).itemsize

    if with_residual and (stride != 1 or l_dense != l):
        raise ValueError("fused residual requires stride=1 and an odd kernel_size")

    x2 = x.reshape(b, w_in)                    # free reshape: time-major, C minor

    # Real per-batch-row VMEM footprint: double-buffered in/out blocks + f32 temps
    # (xp, current/next doubling level, accumulator, trend).
    row_bytes = 2 * w_in * esize + 2 * w_out * esize
    if with_residual:
        row_bytes += 2 * w_in * esize
    row_bytes += 5 * wp * 4
    budget = 24 << 20                          # conservative across v5e/v6e/v7x
    b_tile = _pick_batch_tile(b, row_bytes, budget)
    need = b_tile * row_bytes
    vmem_limit = int(min(max(need + (4 << 20), 32 << 20), 96 << 20))
    # TODO(synk): for very large L*C a lane(-time) tiling pass would be needed to
    # stay under v7x's 64 MiB physical VMEM; batch tiling suffices for DLinear shapes.

    grid = (b // b_tile,)
    kernel = functools.partial(
        _moving_avg_kernel,
        kernel_size=kernel_size, pad=pad, c=c, l=l, l_dense=l_dense,
        front_w=front_w, with_residual=with_residual,
    )

    out_shape = jax.ShapeDtypeStruct((b, w_out), x.dtype)
    out_specs = pl.BlockSpec((b_tile, w_out), lambda i: (i, 0))
    if with_residual:
        out_shape = (out_shape, jax.ShapeDtypeStruct((b, w_in), x.dtype))
        out_specs = (out_specs, pl.BlockSpec((b_tile, w_in), lambda i: (i, 0)))

    outs = pl.pallas_call(
        kernel,
        out_shape=out_shape,
        grid_spec=pltpu.PrefetchScalarGridSpec(
            num_scalar_prefetch=0,
            grid=grid,
            in_specs=[pl.BlockSpec((b_tile, w_in), lambda i: (i, 0))],
            out_specs=out_specs,
        ),
        compiler_params=pltpu.CompilerParams(
            dimension_semantics=("parallel",),
            vmem_limit_bytes=vmem_limit,
        ),
    )(x2)

    if with_residual:
        trend2, seasonal2 = outs
    else:
        trend2, seasonal2 = outs, None

    trend = trend2.reshape(b, l_dense, c)
    if stride > 1:
        trend = trend[:, ::stride, :][:, :l_out, :]
    if with_residual:
        return trend, seasonal2.reshape(b, l, c)
    return trend


def moving_avg(x, kernel_size, stride):
    """x: (B, L, C). Returns the moving-average trend (B, L_out, C) — the module's forward."""
    return _moving_avg_pallas(x, kernel_size, stride, with_residual=False)


def series_decomp(x, kernel_size):
    """Fused DLinear decomposition: returns (trend, seasonal) with seasonal = x - trend.
    Saves the second HBM pass the downstream subtraction would otherwise cost."""
    return _moving_avg_pallas(x, kernel_size, 1, with_residual=True)


def _moving_avg_ref(x, kernel_size, stride):
    """Pure-JAX reference mirroring the PyTorch forward exactly."""
    pad = (kernel_size - 1) // 2
    front = jnp.repeat(x[:, 0:1, :], pad, axis=1)
    end = jnp.repeat(x[:, -1:, :], pad, axis=1)
    xp = jnp.concatenate([front, x, end], axis=1)
    l_pad = xp.shape[1]
    l_out = (l_pad - kernel_size) // stride + 1
    windows = jnp.stack(
        [xp[:, t * stride: t * stride + kernel_size, :] for t in range(l_out)], axis=1
    )  # (B, L_out, K, C)
    return jnp.mean(windows, axis=2)


if __name__ == "__main__":
    # Small shapes consistent with the module: (batch, seq_len, channels).
    B, L, C = 2, 16, 8
    key = jax.random.PRNGKey(0)
    x = jax.random.normal(key, (B, L, C), dtype=jnp.float32)

    # DLinear-style decomposition: odd kernel, stride 1.
    out = jax.block_until_ready(moving_avg(x, 5, 1))
    ref = _moving_avg_ref(x, 5, 1)
    assert out.shape == ref.shape, (out.shape, ref.shape)
    assert jnp.max(jnp.abs(out - ref)) < 1e-5

    # General AvgPool1d path: even kernel, stride 2 (dense kernel + wrapper subsample).
    out2 = jax.block_until_ready(moving_avg(x, 4, 2))
    ref2 = _moving_avg_ref(x, 4, 2)
    assert out2.shape == ref2.shape, (out2.shape, ref2.shape)
    assert jnp.max(jnp.abs(out2 - ref2)) < 1e-5

    # Fused residual path with DLinear's default kernel_size=25 (K > L exercises
    # both replicate-padded edges heavily).
    trend3, seasonal3 = jax.block_until_ready(series_decomp(x, 25))
    ref3 = _moving_avg_ref(x, 25, 1)
    assert trend3.shape == ref3.shape, (trend3.shape, ref3.shape)
    assert jnp.max(jnp.abs(trend3 - ref3)) < 1e-5
    assert jnp.max(jnp.abs(seasonal3 - (x - ref3))) < 1e-5

    print("KERNEL_OK")
</pallas_src>

<mosaic_0001>
module attributes {stable_mosaic.version = 11 : i64} {
  func.func @_moving_avg_kernel(%arg0: i32, %arg1: memref<2x128xf32, #tpu.memory_space<vmem>>, %arg2: memref<2x128xf32, #tpu.memory_space<vmem>>) attributes {dimension_semantics = [#tpu.dimension_semantics<parallel>], iteration_bounds = array<i64: 1>, scalar_prefetch = 0 : i64, scratch_operands = 0 : i64, tpu.core_type = #tpu.core_type<tc>, window_params = [{transform_indices = @transform_0, window_bounds = array<i64: 2, 128>}, {transform_indices = @transform_1, window_bounds = array<i64: 2, 128>}]} {
    %c0 = arith.constant 0 : index
    %c0_0 = arith.constant 0 : index
    %0 = vector.load %arg1[%c0, %c0_0] : memref<2x128xf32, #tpu.memory_space<vmem>>, vector<2x128xf32>
    %1 = vector.extract_strided_slice %0 {offsets = [0, 0], sizes = [2, 8], strides = [1, 1]} : vector<2x128xf32> to vector<2x8xf32>
    %2 = vector.extract_strided_slice %0 {offsets = [0, 120], sizes = [2, 8], strides = [1, 1]} : vector<2x128xf32> to vector<2x8xf32>
    %cst = arith.constant 0.000000e+00 : f32
    %3 = vector.broadcast %cst : f32 to vector<2x120xf32>
    %4 = tpu.concatenate %3, %1 in 1 : vector<2x120xf32>, vector<2x8xf32> -> vector<2x128xf32>
    %cst_1 = arith.constant 0.000000e+00 : f32
    %5 = vector.broadcast %cst_1 : f32 to vector<2x8xf32>
    %6 = vector.extract_strided_slice %4 {offsets = [0, 8], sizes = [2, 120], strides = [1, 1]} : vector<2x128xf32> to vector<2x120xf32>
    %7 = tpu.concatenate %6, %5 in 1 : vector<2x120xf32>, vector<2x8xf32> -> vector<2x128xf32>
    %8 = arith.addf %4, %7 : vector<2x128xf32>
    %cst_2 = arith.constant 0.000000e+00 : f32
    %9 = vector.broadcast %cst_2 : f32 to vector<2x8xf32>
    %10 = tpu.concatenate %2, %9 in 1 : vector<2x8xf32>, vector<2x8xf32> -> vector<2x16xf32>
    %cst_3 = arith.constant 0.000000e+00 : f32
    %11 = vector.broadcast %cst_3 : f32 to vector<2x8xf32>
    %12 = vector.extract_strided_slice %10 {offsets = [0, 0], sizes = [2, 8], strides = [1, 1]} : vector<2x16xf32> to vector<2x8xf32>
    %13 = tpu.concatenate %11, %12 in 1 : vector<2x8xf32>, vector<2x8xf32> -> vector<2x16xf32>
    %14 = arith.addf %10, %13 : vector<2x16xf32>
    %15 = tpu.concatenate %8, %0, %14 in 1 : vector<2x128xf32>, vector<2x128xf32>, vector<2x16xf32> -> vector<2x272xf32>
    %16 = vector.extract_strided_slice %15 {offsets = [0, 112], sizes = [2, 128], strides = [1, 1]} : vector<2x272xf32> to vector<2x128xf32>
    %17 = vector.extract_strided_slice %15 {offsets = [0, 0], sizes = [2, 264], strides = [1, 1]} : vector<2x272xf32> to vector<2x264xf32>
    %18 = vector.extract_strided_slice %15 {offsets = [0, 8], sizes = [2, 264], strides = [1, 1]} : vector<2x272xf32> to vector<2x264xf32>
    %19 = arith.addf %17, %18 : vector<2x264xf32>
    %20 = vector.extract_strided_slice %19 {offsets = [0, 0], sizes = [2, 248], strides = [1, 1]} : vector<2x264xf32> to vector<2x248xf32>
    %21 = vector.extract_strided_slice %19 {offsets = [0, 16], sizes = [2, 248], strides = [1, 1]} : vector<2x264xf32> to vector<2x248xf32>
    %22 = arith.addf %20, %21 : vector<2x248xf32>
    %23 = vector.extract_strided_slice %22 {offsets = [0, 120], sizes = [2, 128], strides = [1, 1]} : vector<2x248xf32> to vector<2x128xf32>
    %24 = arith.addf %16, %23 : vector<2x128xf32>
    %cst_4 = arith.constant 2.000000e-01 : f32
    %25 = vector.broadcast %cst_4 : f32 to vector<2x128xf32>
    %26 = arith.mulf %24, %25 : vector<2x128xf32>
    %c0_5 = arith.constant 0 : index
    %c0_6 = arith.constant 0 : index
    %27 = vector.load %arg2[%c0_5, %c0_6] : memref<2x128xf32, #tpu.memory_space<vmem>>, vector<2x128xf32>
    tpu.vector_store %arg2[%c0_5, %c0_6], %26 {strides = array<i32>} : memref<2x128xf32, #tpu.memory_space<vmem>>, vector<2x128xf32>,
    return
  }
  func.func @transform_0(%arg0: i32) -> (i32, i32) {
    %c0_i32 = arith.constant 0 : i32
    %c0_i32_0 = arith.constant 0 : i32
    return %arg0, %c0_i32 : i32, i32
  }
  func.func @transform_1(%arg0: i32) -> (i32, i32) {
    %c0_i32 = arith.constant 0 : i32
    %c0_i32_0 = arith.constant 0 : i32
    return %arg0, %c0_i32 : i32, i32
  }
}

</mosaic_0001>

<llo_original>
// kernel: tpu_custom_call.1
$region0: #{tpu_custom_call.1}
  #allocation0 [shape = 'u32[]', space=smem, size = 0x4, offset = 0x4, fixed_abs, tag = 'smem constant byte address 0x4 - core index']
  #allocation1 [shape = 'u32[144,128]{1,0:T(1,128)}', space=vmem, size = 0x12000, scoped, tag = 'internal scratch']
  %s0 = inlined_call_operand.hbm [shape: f32[2,128], index: 0, kind: input, shape index: {}]
  %s1 = inlined_call_operand.hbm [shape: f32[2,128], index: 1, kind: output, shape index: {}]
  %s2 = sld [smem:[#allocation0]]
  $region18: #{tpu_custom_call.1} parent=0
    _
  %s4 = ssub.s32 1, %s2
  %s5 = scalar_select 0, %s4, %s2
  $region1: #{tpu_custom_call.1} parent=0
    #allocation2 [shape = 'u8[1024]{0}', space=vmem, size = 0x400, scoped, tag = 'input window, operand 0, single buffered']
    #allocation3 [shape = 's32[1]{0}', space=sflag, size = 0x4, scoped, tag = 'scoped memory for tpu_custom_call.1']
    #allocation4 [shape = 's32[1]{0}', space=sflag, size = 0x4, scoped, tag = 'scoped memory for tpu_custom_call.1']
    #allocation5 [shape = 'u8[1024]{0}', space=vmem, size = 0x400, scoped, tag = 'output window, operand 0, single buffered']
    %6 = vsyncpa [#allocation3], 0
    %7 = vsyncpa [#allocation4], 0
    // Predicated region
    $region2: #{tpu_custom_call.1} parent=1 // pred_check
      _
    $region3: #{tpu_custom_call.1} parent=1 // pred_check_branch
      %9 = sbr.rel (0) target = $region5
    $region4: #{tpu_custom_call.1} parent=1 // pred_region
      %s11 = ssub.s32 32, 32
      %12 = vsyncadd [#allocation3], %s11
      %s14 = sshll.u32 [#allocation2], 4
      %s15 = int_to_ptr.vmem [resolvable:$true] %s14
      %17 = dma.hbm_to_vmem [thread:$0]  %s0, 32, %s15, [#allocation3]
    $region5: #{tpu_custom_call.1} parent=1 // pred_fallthru
      _
    // Predicated region
    $region6: #{tpu_custom_call.1} parent=1 // pred_check
      _
    $region7: #{tpu_custom_call.1} parent=1 // pred_check_branch
      %19 = sbr.rel (0) target = $region9
    $region8: #{tpu_custom_call.1} parent=1 // pred_region
      %20 = dma.done [#allocation3], 32
    $region9: #{tpu_custom_call.1} parent=1 // pred_fallthru
      _
    %v21 = vld [vmem:[#allocation2] sm:$0x3]
    %23 = vrot.lane.b32.xlu0 %v21, 120
    %v24 = vpop.permute.xlu0 %23
    %vm26 = vcmask 982016
    %v27 = vsel %vm26, 0.0, %v24
    %29 = vrot.lane.b32.xlu0 %v27, 120
    %v30 = vpop.permute.xlu0 %29
    %v32 = vsel %vm26, %v30, 0.0
    %v33 = vadd.f32 %v27, %v32
    %34 = vrot.lane.b32.xlu0 %v21, 8
    %v35 = vpop.permute.xlu0 %34
    %vm37 = vcmask 64512
    %v38 = vsel %vm37, %v35, 0.0
    %40 = vrot.lane.b32.xlu0 %v38, 8
    %v41 = vpop.permute.xlu0 %40
    %v43 = vsel %vm37, 0.0, %v41
    %v44 = vadd.f32 %v38, %v43
    %47 = vrot.lane.b32.xlu0 %v33, 120
    %v48 = vpop.permute.xlu0 %47
    %49 = vrot.lane.b32.xlu0 %v44, 120
    %v50 = vpop.permute.xlu0 %49
    %v51 = vsel %vm26, %v48, %v24
    %v52 = vsel %vm26, %v24, %v50
    %v56 = vadd.f32 %v33, %v51
    %v57 = vadd.f32 %v21, %v52
    %v58 = vadd.f32 %v44, %v50
    %62 = vrot.lane.b32.xlu0 %v56, 112
    %v63 = vpop.permute.xlu0 %62
    %64 = vrot.lane.b32.xlu0 %v57, 112
    %v65 = vpop.permute.xlu0 %64
    %66 = vrot.lane.b32.xlu0 %v58, 112
    %v67 = vpop.permute.xlu0 %66
    %vm68 = vcmask 916480
    %v69 = vsel %vm68, %v63, %v65
    %v70 = vsel %vm68, %v65, %v67
    %v73 = vadd.f32 %v56, %v69
    %v74 = vadd.f32 %v57, %v70
    %77 = vrot.lane.b32.xlu0 %v73, 120
    %v78 = vpop.permute.xlu0 %77
    %79 = vrot.lane.b32.xlu0 %v74, 120
    %v80 = vpop.permute.xlu0 %79
    %v81 = vsel %vm26, %v78, %v80
    %v84 = vadd.f32 %v33, %v81
    %v85 = vadd.f32 %v21, %v80
    %v86 = vmul.f32 %v84, 0.2
    %v87 = vmul.f32 %v85, 0.2
    %90 = vrot.lane.b32.xlu0 %v86, 16
    %v91 = vpop.permute.xlu0 %90
    %92 = vrot.lane.b32.xlu0 %v87, 16
    %v93 = vpop.permute.xlu0 %92
    %vm94 = vcmask 130048
    %v95 = vsel %vm94, %v91, %v93
    %97 = vst [vmem:[#allocation5] sm:$0x3] %v95
    // Predicated region
    $region10: #{tpu_custom_call.1} parent=1 // pred_check
      _
    $region11: #{tpu_custom_call.1} parent=1 // pred_check_branch
      %99 = sbr.rel (0) target = $region13
    $region12: #{tpu_custom_call.1} parent=1 // pred_region
      %s101 = ssub.s32 32, 32
      %102 = vsyncadd [#allocation4], %s101
      %s104 = sshll.u32 [#allocation5], 4
      %s105 = int_to_ptr.vmem [resolvable:$true] %s104
      %107 = dma.vmem_to_hbm [thread:$0]  %s105, 32, %s1, [#allocation4]
    $region13: #{tpu_custom_call.1} parent=1 // pred_fallthru
      _
    // Predicated region
    $region14: #{tpu_custom_call.1} parent=1 // pred_check
      _
    $region15: #{tpu_custom_call.1} parent=1 // pred_check_branch
      %109 = sbr.rel (0) target = $region17
    $region16: #{tpu_custom_call.1} parent=1 // pred_region
      %110 = dma.done [#allocation4], 32
    $region17: #{tpu_custom_call.1} parent=1 // pred_fallthru
      _
    %111 = vsyncpa [#allocation3], 1
    %112 = vsyncpa [#allocation4], 1

</llo_original>
